<compile_context>
chip_gen: v7x
topology: tpu7x:2x2x1
jax: 0.10.0
libtpu: 0.0.40
codegen_flags: <defaults>
</compile_context>

<pallas_src>
import jax
import jax.numpy as jnp
from jax.experimental import pallas as pl
from jax.experimental.pallas import tpu as pltpu

_LANES = 1024                    # last-dim width: multiple of 128 -> unmasked lane-dense vst
_MAX_ROWS = 2048                 # default row tile: 2048x1024 f32 = 8 MiB per buffer
_MIN_PALLAS_ELEMS = 256 * 1024   # below this a standalone pallas_call is not worth its launch cost


def _momentum_side_kernel(beta_ref, x_ref, o_ref):
    # MomentumNetSide.forward: inp * beta (elementwise, VPU-only, memory-bound).
    o_ref[...] = (x_ref[...] * beta_ref[0, 0]).astype(o_ref.dtype)


def _xla_scale(inp, beta):
    beta32 = jnp.asarray(beta, jnp.float32)
    if jnp.issubdtype(inp.dtype, jnp.floating):
        # Keep the input dtype (torch float-tensor * python-float semantics).
        return (inp.astype(jnp.float32) * beta32).astype(inp.dtype)
    # Integer input * float scalar -> float result (matches torch promotion).
    return inp * beta32


def momentum_net_side(inp, beta, *, max_rows=_MAX_ROWS,
                      min_pallas_elements=_MIN_PALLAS_ELEMS,
                      donate_input=False):
    """Pallas TPU implementation of MomentumNetSide.forward: returns inp * beta."""
    n = inp.size
    use_pallas = (
        n > 0
        and jnp.issubdtype(inp.dtype, jnp.floating)
        and n % _LANES == 0
        and n >= min_pallas_elements
    )
    if not use_pallas:
        # Ragged / tiny / non-float inputs: a fused XLA multiply is already one
        # read + one write at the HBM roofline.
        return _xla_scale(inp, beta)

    rows = n // _LANES
    max_rows = max(8, (max_rows // 8) * 8)      # respect the (8, 128) block rule
    tile_rows = min(max_rows, rows)             # == rows (full dim) when rows < max_rows

    x2 = inp.reshape(rows, _LANES)              # no-copy reshape; no padding, no slicing
    beta_arr = jnp.asarray(beta, jnp.float32).reshape(1, 1)

    # Right-size the scoped VMEM limit: in + out, double-buffered, plus headroom.
    tile_bytes = tile_rows * _LANES * x2.dtype.itemsize
    vmem_bytes = int(max(16 << 20, min(4 * tile_bytes + (4 << 20), 48 << 20)))

    out2 = pl.pallas_call(
        _momentum_side_kernel,
        out_shape=jax.ShapeDtypeStruct((rows, _LANES), inp.dtype),
        grid=(pl.cdiv(rows, tile_rows),),       # partial final block is masked by Pallas
        in_specs=[
            pl.BlockSpec(memory_space=pltpu.MemorySpace.SMEM),     # beta scalar
            pl.BlockSpec((tile_rows, _LANES), lambda i: (i, 0)),
        ],
        out_specs=pl.BlockSpec((tile_rows, _LANES), lambda i: (i, 0)),
        compiler_params=pltpu.CompilerParams(
            dimension_semantics=("parallel",),   # independent tiles -> v7x 2-TC sharding
            vmem_limit_bytes=vmem_bytes,
        ),
        input_output_aliases=({1: 0} if donate_input else {}),
    )(beta_arr, x2)

    return out2.reshape(inp.shape)


if __name__ == "__main__":
    key = jax.random.PRNGKey(0)
    k1, k2, k3, k4 = jax.random.split(key, 4)
    beta = 0.9

    # 1) Canonical module shape (2,4,16,16): 2048 elems = 2 lane-dense rows.
    #    Force the Pallas path (it is below the default small-size threshold).
    x = jax.random.normal(k1, (2, 4, 16, 16), jnp.float32)
    out = jax.block_until_ready(momentum_net_side(x, beta, min_pallas_elements=0))
    ref = x * beta
    assert out.shape == x.shape and out.dtype == x.dtype
    assert jnp.allclose(out, ref, rtol=1e-6, atol=1e-6), float(jnp.max(jnp.abs(out - ref)))

    # 2) Default Pallas path above the threshold, with a partial final row-block
    #    (rows=520 not a multiple of max_rows=128 -> Pallas masks the last block)
    #    and with input donation (input_output_aliases).
    x2 = jax.random.normal(k2, (520, 1024), jnp.float32)
    ref2 = x2 * beta
    out2 = jax.block_until_ready(
        momentum_net_side(x2, beta, max_rows=128, donate_input=True))
    assert out2.shape == x2.shape and out2.dtype == x2.dtype
    assert jnp.allclose(out2, ref2, rtol=1e-6, atol=1e-6), float(jnp.max(jnp.abs(out2 - ref2)))

    # 3) bf16 input keeps bf16 output (beta applied in f32, rounded back).
    x3 = jax.random.normal(k3, (64, 1024), jnp.float32).astype(jnp.bfloat16)
    ref3 = (x3.astype(jnp.float32) * beta).astype(jnp.bfloat16)
    out3 = jax.block_until_ready(momentum_net_side(x3, beta, min_pallas_elements=0))
    assert out3.dtype == jnp.bfloat16 and out3.shape == x3.shape
    assert jnp.allclose(out3.astype(jnp.float32), ref3.astype(jnp.float32),
                        rtol=1e-2, atol=1e-2)

    # 4) Ragged shape -> XLA fallback path (no pad / slice passes).
    y = jax.random.normal(k4, (3, 5, 7), jnp.float32)
    out4 = jax.block_until_ready(momentum_net_side(y, beta))
    ref4 = y * beta
    assert out4.shape == y.shape and out4.dtype == y.dtype
    assert jnp.allclose(out4, ref4, rtol=1e-6, atol=1e-6)

    # 5) Traced beta under jit (beta is a runtime SMEM operand, no recompile/bake).
    f = jax.jit(lambda a, b: momentum_net_side(a, b, min_pallas_elements=0))
    out5 = jax.block_until_ready(f(x, jnp.float32(0.5)))
    ref5 = x * 0.5
    assert jnp.allclose(out5, ref5, rtol=1e-6, atol=1e-6)

    print("KERNEL_OK")
</pallas_src>

<mosaic_0001>
module attributes {stable_mosaic.version = 11 : i64} {
  func.func @_momentum_side_kernel(%arg0: i32, %arg1: memref<1x1xf32, #tpu.memory_space<smem>>, %arg2: memref<2x1024xf32, #tpu.memory_space<vmem>>, %arg3: memref<2x1024xf32, #tpu.memory_space<vmem>>) attributes {dimension_semantics = [#tpu.dimension_semantics<parallel>], iteration_bounds = array<i64: 1>, scalar_prefetch = 0 : i64, scratch_operands = 0 : i64, tpu.core_type = #tpu.core_type<tc>, window_params = [{transform_indices = @transform_0, window_bounds = array<i64: 1, 1>}, {transform_indices = @transform_1, window_bounds = array<i64: 2, 1024>}, {transform_indices = @transform_2, window_bounds = array<i64: 2, 1024>}]} {
    %c0 = arith.constant 0 : index
    %c0_0 = arith.constant 0 : index
    %0 = vector.load %arg2[%c0, %c0_0] : memref<2x1024xf32, #tpu.memory_space<vmem>>, vector<2x1024xf32>
    %c0_1 = arith.constant 0 : index
    %c0_2 = arith.constant 0 : index
    %1 = memref.load %arg1[%c0_1, %c0_2] : memref<1x1xf32, #tpu.memory_space<smem>>
    %2 = vector.broadcast %1 : f32 to vector<2x1024xf32>
    %3 = arith.mulf %0, %2 : vector<2x1024xf32>
    %c0_3 = arith.constant 0 : index
    %c0_4 = arith.constant 0 : index
    %4 = vector.load %arg3[%c0_3, %c0_4] : memref<2x1024xf32, #tpu.memory_space<vmem>>, vector<2x1024xf32>
    tpu.vector_store %arg3[%c0_3, %c0_4], %3 {strides = array<i32>} : memref<2x1024xf32, #tpu.memory_space<vmem>>, vector<2x1024xf32>,
    return
  }
  func.func @transform_0(%arg0: i32) -> (i32, i32) {
    %c0_i32 = arith.constant 0 : i32
    %c0_i32_0 = arith.constant 0 : i32
    %c0_i32_1 = arith.constant 0 : i32
    return %c0_i32, %c0_i32_0 : i32, i32
  }
  func.func @transform_1(%arg0: i32) -> (i32, i32) {
    %c0_i32 = arith.constant 0 : i32
    %c0_i32_0 = arith.constant 0 : i32
    return %arg0, %c0_i32 : i32, i32
  }
  func.func @transform_2(%arg0: i32) -> (i32, i32) {
    %c0_i32 = arith.constant 0 : i32
    %c0_i32_0 = arith.constant 0 : i32
    return %arg0, %c0_i32 : i32, i32
  }
}

</mosaic_0001>

<llo_original>
// kernel: tpu_custom_call.1
$region0: #{tpu_custom_call.1}
  #allocation0 [shape = 'u32[]', space=smem, size = 0x4, offset = 0x4, fixed_abs, tag = 'smem constant byte address 0x4 - core index']
  #allocation1 [shape = 'u32[144,128]{1,0:T(1,128)}', space=vmem, size = 0x12000, scoped, tag = 'internal scratch']
  #allocation2 [shape = 'f32[1,1]{1,0:T(1,128)S(6)}', space=smem, size = 0x200, scoped, tag = 'scoped memory for tpu_custom_call.1']
  %s0 = inlined_call_operand.<no memory space> [shape: f32[1,1], index: 0, kind: input, shape index: {}]
  %s1 = inlined_call_operand.hbm [shape: f32[2,1024], index: 1, kind: input, shape index: {}]
  %s2 = inlined_call_operand.hbm [shape: f32[2,1024], index: 2, kind: output, shape index: {}]
  %s3 = sld [smem:[#allocation0]]
  $region22: #{tpu_custom_call.1} parent=0
    _
  %s5 = ssub.s32 1, %s3
  %s6 = scalar_select 0, %s5, %s3
  %7 = sst [smem:[#allocation2]] %s0
  $region1: #{tpu_custom_call.1} parent=0
    #allocation3 [shape = 'u8[8192]{0}', space=vmem, size = 0x2000, scoped, tag = 'input window, operand 1, single buffered']
    #allocation4 [shape = 's32[1]{0}', space=sflag, size = 0x4, scoped, tag = 'scoped memory for tpu_custom_call.1']
    #allocation5 [shape = 's32[1]{0}', space=sflag, size = 0x4, scoped, tag = 'scoped memory for tpu_custom_call.1']
    #allocation6 [shape = 'u8[8192]{0}', space=vmem, size = 0x2000, scoped, tag = 'output window, operand 0, single buffered']
    %8 = vsyncpa [#allocation4], 0
    %9 = vsyncpa [#allocation5], 0
    // Predicated region
    $region2: #{tpu_custom_call.1} parent=1 // pred_check
      _
    $region3: #{tpu_custom_call.1} parent=1 // pred_check_branch
      %11 = sbr.rel (0) target = $region5
    $region4: #{tpu_custom_call.1} parent=1 // pred_region
      _
    $region5: #{tpu_custom_call.1} parent=1 // pred_fallthru
      _
    // Predicated region
    $region6: #{tpu_custom_call.1} parent=1 // pred_check
      _
    $region7: #{tpu_custom_call.1} parent=1 // pred_check_branch
      %13 = sbr.rel (0) target = $region9
    $region8: #{tpu_custom_call.1} parent=1 // pred_region
      %s15 = ssub.s32 256, 256
      %16 = vsyncadd [#allocation4], %s15
      %s18 = sshll.u32 [#allocation3], 4
      %s19 = int_to_ptr.vmem [resolvable:$true] %s18
      %21 = dma.hbm_to_vmem [thread:$0]  %s1, 256, %s19, [#allocation4]
    $region9: #{tpu_custom_call.1} parent=1 // pred_fallthru
      _
    // Predicated region
    $region10: #{tpu_custom_call.1} parent=1 // pred_check
      _
    $region11: #{tpu_custom_call.1} parent=1 // pred_check_branch
      %23 = sbr.rel (0) target = $region13
    $region12: #{tpu_custom_call.1} parent=1 // pred_region
      %24 = dma.done [#allocation4], 256
    $region13: #{tpu_custom_call.1} parent=1 // pred_fallthru
      _
    %v25 = vld [vmem:[#allocation3] sm:$0xff]
    %v26 = vld [vmem:[#allocation3 + $0x8] sm:$0xff]
    %s27 = sld [smem:[#allocation2]]
    %v28 = vstv %s27
    %v29 = vmul.f32 %v25, %v28
    %v30 = vmul.f32 %v26, %v28
    %31 = vst [vmem:[#allocation6] sm:$0xff] %v29
    %32 = vst [vmem:[#allocation6 + $0x8] sm:$0xff] %v30
    // Predicated region
    $region14: #{tpu_custom_call.1} parent=1 // pred_check
      _
    $region15: #{tpu_custom_call.1} parent=1 // pred_check_branch
      %34 = sbr.rel (0) target = $region17
    $region16: #{tpu_custom_call.1} parent=1 // pred_region
      %s36 = ssub.s32 256, 256
      %37 = vsyncadd [#allocation5], %s36
      %s39 = sshll.u32 [#allocation6], 4
      %s40 = int_to_ptr.vmem [resolvable:$true] %s39
      %42 = dma.vmem_to_hbm [thread:$0]  %s40, 256, %s2, [#allocation5]
    $region17: #{tpu_custom_call.1} parent=1 // pred_fallthru
      _
    // Predicated region
    $region18: #{tpu_custom_call.1} parent=1 // pred_check
      _
    $region19: #{tpu_custom_call.1} parent=1 // pred_check_branch
      %44 = sbr.rel (0) target = $region21
    $region20: #{tpu_custom_call.1} parent=1 // pred_region
      %45 = dma.done [#allocation5], 256
    $region21: #{tpu_custom_call.1} parent=1 // pred_fallthru
      _
    %46 = vsyncpa [#allocation4], 1
    %47 = vsyncpa [#allocation5], 1

</llo_original>
